<compile_context>
chip_gen: v7x
topology: tpu7x:2x2x1
jax: 0.10.0
libtpu: 0.0.40
codegen_flags: <defaults>
</compile_context>

<pallas_src>
import functools
from typing import NamedTuple

import jax
import jax.numpy as jnp
from jax.experimental import pallas as pl
from jax.experimental.pallas import tpu as pltpu

# VMEM budgeting: keep live tile bytes under this on every generation (v7x has only
# 64 MiB physical VMEM), and raise the scoped limit to a value that is still safely
# below v7x's physical capacity while unlocking bigger tiles on v5e/v6e.
_VMEM_TILE_BUDGET = 44 * 1024 * 1024
_VMEM_LIMIT_BYTES = 56 * 1024 * 1024


def _round_up(x: int, m: int) -> int:
    return ((x + m - 1) // m) * m


class _Plan(NamedTuple):
    TM: int
    TN: int
    TK: int
    Mp: int
    Np: int
    Kp: int
    split_k: bool
    use_scratch: bool


def _live_bytes(TM, TN, TK, out_itemsize, use_scratch):
    """Approximate peak VMEM for the double-buffered pipeline."""
    x_b = 2 * TM * TK * 2          # bf16 x tile, double buffered
    w_b = 2 * TK * TN * 2          # bf16 W tile, double buffered
    b_b = 2 * TN * 4               # f32 bias row
    o_b = 2 * TM * TN * out_itemsize
    acc = TM * TN * 4 if use_scratch else 0
    return x_b + w_b + b_b + o_b + acc


def _plan(B, D, C, tm, tn, tk, out_dtype) -> _Plan:
    """Pick tile sizes / padded shapes for y = x @ W^T + b (static Python ints only)."""
    tm = max(16, _round_up(tm, 16))
    tn = max(128, _round_up(tn, 128))
    tk = max(128, _round_up(tk, 128))
    out_isz = jnp.dtype(out_dtype).itemsize

    # bf16 packs 16 rows per vreg -> M padded to 16; K/N lane-dense -> 128.
    TM = min(tm, _round_up(B, 16))
    TN = min(tn, _round_up(C, 128))
    Mp = _round_up(B, TM)

    # Megacore balance (v7x has 2 TensorCores): make sure the parallel M x N grid has
    # at least 2 tiles when the shape allows it.
    while (Mp // TM) * (_round_up(C, TN) // TN) < 2 and TN > 128:
        TN = _round_up(TN // 2, 128)

    Kp_full = _round_up(D, 128)

    # Prefer TK = full K (no reduction grid axis, x reused across the whole N axis).
    if _live_bytes(TM, TN, Kp_full, out_isz, use_scratch=False) <= _VMEM_TILE_BUDGET:
        TK = Kp_full
        use_scratch = False
    else:
        use_scratch = jnp.dtype(out_dtype) != jnp.dtype(jnp.float32)
        TK = min(tk, Kp_full)
        while _live_bytes(TM, TN, TK, out_isz, use_scratch) > _VMEM_TILE_BUDGET and TK > 128:
            TK = _round_up(TK // 2, 128)
        while _live_bytes(TM, TN, TK, out_isz, use_scratch) > _VMEM_TILE_BUDGET and TN > 128:
            TN = _round_up(TN // 2, 128)
        while _live_bytes(TM, TN, TK, out_isz, use_scratch) > _VMEM_TILE_BUDGET and TM > 16:
            TM = max(16, _round_up(TM // 2, 16))

    Mp = _round_up(B, TM)
    Np = _round_up(C, TN)
    Kp = _round_up(D, TK)
    split_k = (Kp // TK) > 1
    if not split_k:
        use_scratch = False
    return _Plan(TM, TN, TK, Mp, Np, Kp, split_k, use_scratch)


# ----------------------------- kernels ---------------------------------------


def _linear_kernel_fused(x_ref, w_ref, b_ref, o_ref):
    """Whole-K tile: one MXU pass, bias added once, no reduction axis."""
    o_ref[...] = (
        jnp.dot(x_ref[...], w_ref[...], preferred_element_type=jnp.float32)
        + b_ref[...]
    ).astype(o_ref.dtype)


def _linear_kernel_split_f32(x_ref, w_ref, b_ref, o_ref):
    """K-split path, f32 output: accumulate directly into the resident output block."""
    k = pl.program_id(2)

    @pl.when(k == 0)
    def _init():
        o_ref[...] = jnp.broadcast_to(b_ref[...], o_ref.shape)

    o_ref[...] += jnp.dot(x_ref[...], w_ref[...], preferred_element_type=jnp.float32)


def _linear_kernel_split_scratch(x_ref, w_ref, b_ref, o_ref, acc_ref):
    """K-split path, non-f32 output: f32 scratch accumulator, cast in the epilogue."""
    k = pl.program_id(2)

    @pl.when(k == 0)
    def _init():
        acc_ref[...] = jnp.broadcast_to(b_ref[...], acc_ref.shape)

    acc_ref[...] += jnp.dot(x_ref[...], w_ref[...], preferred_element_type=jnp.float32)

    @pl.when(k == pl.num_programs(2) - 1)
    def _store():
        o_ref[...] = acc_ref[...].astype(o_ref.dtype)


# ----------------------------- wrapper ----------------------------------------


def _linear_apply(x, w_p, b_p, plan: _Plan, num_classes: int, out_dtype):
    B, D = x.shape
    TM, TN, TK, Mp, Np, Kp, split_k, use_scratch = plan

    # Cast to bf16 for the MXU; only pad when the shape is ragged (static check).
    x_p = x.astype(jnp.bfloat16)
    if (B, D) != (Mp, Kp):
        x_p = jnp.zeros((Mp, Kp), jnp.bfloat16).at[:B, :D].set(x_p)

    grid_m, grid_n, grid_k = Mp // TM, Np // TN, Kp // TK
    out_isz = jnp.dtype(out_dtype).itemsize

    # Real traffic: x refetched per N tile, W refetched per M tile, output written once.
    flops = 2 * Mp * Kp * Np
    bytes_accessed = (
        grid_n * Mp * Kp * 2 + grid_m * Kp * Np * 2 + Mp * Np * out_isz + grid_m * Np * 4
    )
    cost = pl.CostEstimate(flops=flops, transcendentals=0, bytes_accessed=bytes_accessed)

    if not split_k:
        y_p = pl.pallas_call(
            _linear_kernel_fused,
            out_shape=jax.ShapeDtypeStruct((Mp, Np), out_dtype),
            grid=(grid_m, grid_n),
            in_specs=[
                # x block index is constant across j (innermost axis) -> no re-DMA of x.
                pl.BlockSpec((TM, TK), lambda i, j: (i, 0)),
                pl.BlockSpec((TK, TN), lambda i, j: (0, j)),
                pl.BlockSpec((1, TN), lambda i, j: (0, j)),
            ],
            out_specs=pl.BlockSpec((TM, TN), lambda i, j: (i, j)),
            compiler_params=pltpu.CompilerParams(
                dimension_semantics=("parallel", "parallel"),
                vmem_limit_bytes=_VMEM_LIMIT_BYTES,
            ),
            cost_estimate=cost,
        )(x_p, w_p, b_p)
    else:
        kernel = _linear_kernel_split_scratch if use_scratch else _linear_kernel_split_f32
        scratch = [pltpu.VMEM((TM, TN), jnp.float32)] if use_scratch else []
        # NOTE: if the streamed W DMA is still exposed on v5e/v6e after the larger
        # tiles, pipeline_mode=pl.Buffered(3) on the W BlockSpec is the next lever.
        y_p = pl.pallas_call(
            kernel,
            out_shape=jax.ShapeDtypeStruct((Mp, Np), out_dtype),
            grid=(grid_m, grid_n, grid_k),
            in_specs=[
                pl.BlockSpec((TM, TK), lambda i, j, k: (i, k)),
                pl.BlockSpec((TK, TN), lambda i, j, k: (k, j)),
                pl.BlockSpec((1, TN), lambda i, j, k: (0, j)),
            ],
            out_specs=pl.BlockSpec((TM, TN), lambda i, j, k: (i, j)),
            scratch_shapes=scratch,
            compiler_params=pltpu.CompilerParams(
                dimension_semantics=("parallel", "parallel", "arbitrary"),
                vmem_limit_bytes=_VMEM_LIMIT_BYTES,
            ),
            cost_estimate=cost,
        )(x_p, w_p, b_p)

    if (Mp, Np) != (B, num_classes):
        y_p = y_p[:B, :num_classes]
    return y_p


def make_linear_mapping(w, b, batch_size, *, tm=512, tn=512, tk=2048,
                        out_dtype=jnp.float32):
    """Prepare nn.Linear params once and return a jitted `apply(x)` closure.

    w: (num_classes, input_dim) float32   -- PyTorch fc.weight layout
    b: (num_classes,)           float32
    apply(x): x (batch, input_dim) -> (batch, num_classes) in `out_dtype`.
    """
    C, D = w.shape
    plan = _plan(batch_size, D, C, tm, tn, tk, out_dtype)

    # --- one-time weight prep (outside the per-call hot path) ------------------
    w_t = jnp.asarray(w).T.astype(jnp.bfloat16)          # (D, C) bf16, MXU layout
    if (D, C) != (plan.Kp, plan.Np):
        w_prep = jnp.zeros((plan.Kp, plan.Np), jnp.bfloat16).at[:D, :C].set(w_t)
    else:
        w_prep = w_t
    b_f32 = jnp.asarray(b).astype(jnp.float32).reshape(1, C)
    if C != plan.Np:
        b_prep = jnp.zeros((1, plan.Np), jnp.float32).at[:, :C].set(b_f32)
    else:
        b_prep = b_f32
    w_prep = jax.device_put(w_prep)
    b_prep = jax.device_put(b_prep)

    jitted = jax.jit(
        functools.partial(_linear_apply, plan=plan, num_classes=C, out_dtype=out_dtype)
    )

    def apply(x):
        return jitted(x, w_prep, b_prep)

    return apply


def linear_mapping(x, w, b, **kwargs):
    """One-shot convenience (re-prepares weights every call; prefer make_linear_mapping)."""
    return make_linear_mapping(w, b, x.shape[0], **kwargs)(x)


if __name__ == "__main__":
    # Small shapes consistent with the module: batch=8, input_dim=32, num_classes=16.
    # TODO(synk): at this demo size a plain jnp.dot beats any standalone Pallas kernel
    # (per-call overhead >> 8K FLOPs); the kernel/tiling is sized for realistic layers.
    batch, input_dim, num_classes = 8, 32, 16

    key = jax.random.PRNGKey(0)
    kx, kw, kb = jax.random.split(key, 3)

    bound = 1.0 / (input_dim ** 0.5)
    x = jax.random.normal(kx, (batch, input_dim), dtype=jnp.float32)
    # PyTorch weight layout: (num_classes, input_dim).
    w = jax.random.uniform(kw, (num_classes, input_dim), dtype=jnp.float32,
                           minval=-bound, maxval=bound)
    b = jax.random.uniform(kb, (num_classes,), dtype=jnp.float32,
                           minval=-bound, maxval=bound)

    apply = make_linear_mapping(w, b, batch_size=batch)   # weight prep happens once here
    y = apply(x)
    jax.block_until_ready(y)
    assert y.shape == (batch, num_classes)
    assert y.dtype == jnp.float32

    # Reference with matching bf16 operand rounding (kernel uses bf16 MXU operands with
    # f32 accumulation), plus a looser sanity check against the pure-f32 reference.
    y_ref_bf16 = jnp.dot(
        x.astype(jnp.bfloat16), w.T.astype(jnp.bfloat16),
        preferred_element_type=jnp.float32,
    ) + b
    y_ref_f32 = x @ w.T + b
    assert jnp.allclose(y, y_ref_bf16, atol=1e-3, rtol=1e-3), "mismatch vs bf16 reference"
    assert jnp.allclose(y, y_ref_f32, atol=1e-1, rtol=1e-1), "mismatch vs f32 reference"

    # Exercise the second call (hot path: no weight prep, already-compiled).
    y2 = apply(x)
    jax.block_until_ready(y2)
    assert jnp.allclose(y, y2)

    print("KERNEL_OK")
</pallas_src>

<mosaic_0001>
module attributes {stable_mosaic.version = 11 : i64} {
  func.func @_linear_kernel_fused(%arg0: i32, %arg1: i32, %arg2: memref<16x128xbf16, #tpu.memory_space<vmem>>, %arg3: memref<128x128xbf16, #tpu.memory_space<vmem>>, %arg4: memref<1x128xf32, #tpu.memory_space<vmem>>, %arg5: memref<16x128xf32, #tpu.memory_space<vmem>>) attributes {dimension_semantics = [#tpu.dimension_semantics<parallel>, #tpu.dimension_semantics<parallel>], iteration_bounds = array<i64: 1, 1>, scalar_prefetch = 0 : i64, scratch_operands = 0 : i64, tpu.core_type = #tpu.core_type<tc>, window_params = [{transform_indices = @transform_0, window_bounds = array<i64: 16, 128>}, {transform_indices = @transform_1, window_bounds = array<i64: 128, 128>}, {transform_indices = @transform_2, window_bounds = array<i64: 1, 128>}, {transform_indices = @transform_3, window_bounds = array<i64: 16, 128>}]} {
    %c0 = arith.constant 0 : index
    %c0_0 = arith.constant 0 : index
    %0 = vector.load %arg2[%c0, %c0_0] : memref<16x128xbf16, #tpu.memory_space<vmem>>, vector<16x128xbf16>
    %c0_1 = arith.constant 0 : index
    %c0_2 = arith.constant 0 : index
    %1 = vector.load %arg3[%c0_1, %c0_2] : memref<128x128xbf16, #tpu.memory_space<vmem>>, vector<128x128xbf16>
    %cst = arith.constant dense<0.000000e+00> : vector<16x128xf32>
    %2 = tpu.matmul %0, %1, %cst {dimension_numbers = #tpu.dot_dimension_numbers<[1], [0], [0], [1], [0, 0, 1, 1], [], []>} : vector<16x128xbf16>, vector<128x128xbf16>, vector<16x128xf32> -> vector<16x128xf32>
    %c0_3 = arith.constant 0 : index
    %c0_4 = arith.constant 0 : index
    %3 = vector.load %arg4[%c0_3, %c0_4] : memref<1x128xf32, #tpu.memory_space<vmem>>, vector<1x128xf32>
    %4 = vector.broadcast %3 : vector<1x128xf32> to vector<16x128xf32>
    %5 = arith.addf %2, %4 : vector<16x128xf32>
    %c0_5 = arith.constant 0 : index
    %c0_6 = arith.constant 0 : index
    %6 = vector.load %arg5[%c0_5, %c0_6] : memref<16x128xf32, #tpu.memory_space<vmem>>, vector<16x128xf32>
    tpu.vector_store %arg5[%c0_5, %c0_6], %5 {strides = array<i32>} : memref<16x128xf32, #tpu.memory_space<vmem>>, vector<16x128xf32>,
    return
  }
  func.func @transform_0(%arg0: i32, %arg1: i32) -> (i32, i32) {
    %c0_i32 = arith.constant 0 : i32
    %c0_i32_0 = arith.constant 0 : i32
    return %arg0, %c0_i32 : i32, i32
  }
  func.func @transform_1(%arg0: i32, %arg1: i32) -> (i32, i32) {
    %c0_i32 = arith.constant 0 : i32
    %c0_i32_0 = arith.constant 0 : i32
    return %c0_i32, %arg1 : i32, i32
  }
  func.func @transform_2(%arg0: i32, %arg1: i32) -> (i32, i32) {
    %c0_i32 = arith.constant 0 : i32
    %c0_i32_0 = arith.constant 0 : i32
    return %c0_i32, %arg1 : i32, i32
  }
  func.func @transform_3(%arg0: i32, %arg1: i32) -> (i32, i32) {
    %c0_i32 = arith.constant 0 : i32
    return %arg0, %arg1 : i32, i32
  }
}

</mosaic_0001>

<llo_original>
// kernel: _linear_apply.1
$region0: #{_linear_apply.1}
  #allocation0 [shape = 'u32[]', space=smem, size = 0x4, offset = 0x4, fixed_abs, tag = 'smem constant byte address 0x4 - core index']
  #allocation1 [shape = 'u32[144,128]{1,0:T(1,128)}', space=vmem, size = 0x12000, scoped, tag = 'internal scratch']
  %s0 = inlined_call_operand.vmem [shape: bf16[16,128], index: 0, kind: input, shape index: {}]
  %s1 = inlined_call_operand.hbm [shape: bf16[128,128], index: 1, kind: input, shape index: {}]
  %s2 = inlined_call_operand.vmem [shape: f32[1,128], index: 2, kind: input, shape index: {}]
  %s3 = inlined_call_operand.vmem [shape: f32[16,128], index: 3, kind: output, shape index: {}]
  %s4 = sld [smem:[#allocation0]]
  $region26: #{_linear_apply.1} parent=0
    _
  %s6 = ssub.s32 1, %s4
  %s7 = scalar_select 0, %s6, %s4
  $region1: #{_linear_apply.1} parent=0
    #allocation2 [shape = 'u8[32768]{0}', space=vmem, size = 0x8000, scoped, tag = 'input window, operand 1, single buffered']
    #allocation3 [shape = 's32[1]{0}', space=sflag, size = 0x4, scoped, tag = 'scoped memory for _linear_apply.1']
    %8 = vsyncpa [#allocation3], 0
    // Predicated region
    $region2: #{_linear_apply.1} parent=1 // pred_check
      _
    $region3: #{_linear_apply.1} parent=1 // pred_check_branch
      %10 = sbr.rel (0) target = $region5
    $region4: #{_linear_apply.1} parent=1 // pred_region
      _
    $region5: #{_linear_apply.1} parent=1 // pred_fallthru
      _
    // Predicated region
    $region6: #{_linear_apply.1} parent=1 // pred_check
      _
    $region7: #{_linear_apply.1} parent=1 // pred_check_branch
      %12 = sbr.rel (0) target = $region9
    $region8: #{_linear_apply.1} parent=1 // pred_region
      %s14 = ssub.s32 1024, 1024
      %15 = vsyncadd [#allocation3], %s14
      %s16 = sshll.u32 [#allocation2], 4
      %s17 = int_to_ptr.vmem [resolvable:$true] %s16
      %22 = dma.hbm_to_vmem [thread:$0]  %s1, 1024, %s17, [#allocation3], 64, 64, 4
    $region9: #{_linear_apply.1} parent=1 // pred_fallthru
      _
    // Predicated region
    $region10: #{_linear_apply.1} parent=1 // pred_check
      _
    $region11: #{_linear_apply.1} parent=1 // pred_check_branch
      %24 = sbr.rel (0) target = $region13
    $region12: #{_linear_apply.1} parent=1 // pred_region
      _
    $region13: #{_linear_apply.1} parent=1 // pred_fallthru
      _
    // Predicated region
    $region14: #{_linear_apply.1} parent=1 // pred_check
      _
    $region15: #{_linear_apply.1} parent=1 // pred_check_branch
      %26 = sbr.rel (0) target = $region17
    $region16: #{_linear_apply.1} parent=1 // pred_region
      %27 = dma.done [#allocation3], 1024
    $region17: #{_linear_apply.1} parent=1 // pred_fallthru
      _
    %v29 = vld [vmem:[%s0] sm:$0xf]
    %v30 = vld [vmem:[%s0 + $0x4] sm:$0xf]
    %v31 = vld [vmem:[#allocation2] sm:$0xf]
    %v32 = vld [vmem:[#allocation2 + $0x4] sm:$0xf]
    %v33 = vld [vmem:[#allocation2 + $0x8] sm:$0xf]
    %v34 = vld [vmem:[#allocation2 + $0xc] sm:$0xf]
    %v35 = vld [vmem:[#allocation2 + $0x10] sm:$0xf]
    %v36 = vld [vmem:[#allocation2 + $0x14] sm:$0xf]
    %v37 = vld [vmem:[#allocation2 + $0x18] sm:$0xf]
    %v38 = vld [vmem:[#allocation2 + $0x1c] sm:$0xf]
    %v39 = vld [vmem:[#allocation2 + $0x20] sm:$0xf]
    %v40 = vld [vmem:[#allocation2 + $0x24] sm:$0xf]
    %v41 = vld [vmem:[#allocation2 + $0x28] sm:$0xf]
    %v42 = vld [vmem:[#allocation2 + $0x2c] sm:$0xf]
    %v43 = vld [vmem:[#allocation2 + $0x30] sm:$0xf]
    %v44 = vld [vmem:[#allocation2 + $0x34] sm:$0xf]
    %v45 = vld [vmem:[#allocation2 + $0x38] sm:$0xf]
    %v46 = vld [vmem:[#allocation2 + $0x3c] sm:$0xf]
    %v47 = vld [vmem:[%s2] sm:$0x1]
    %v49 = vlaneseq
    %v50 = vshrl.u32 %v49, 7
    %v51 = vsub.s32 0, %v50
    %v52 = vrot.slane %v47, %v51
    %v56 = vunpack.c.l.b16 %v29
    %v57 = vunpack.c.l.b16 %v30
    %v58 = vpack.c.b16 %v57, %v56
    %v76 = vunpack.c.l.b16 %v31
    %v77 = vunpack.c.l.b16 %v32
    %v78 = vunpack.c.l.b16 %v33
    %v79 = vunpack.c.l.b16 %v34
    %v80 = vunpack.c.l.b16 %v35
    %v81 = vunpack.c.l.b16 %v36
    %v82 = vunpack.c.l.b16 %v37
    %v83 = vunpack.c.l.b16 %v38
    %v84 = vunpack.c.l.b16 %v39
    %v85 = vunpack.c.l.b16 %v40
    %v86 = vunpack.c.l.b16 %v41
    %v87 = vunpack.c.l.b16 %v42
    %v88 = vunpack.c.l.b16 %v43
    %v89 = vunpack.c.l.b16 %v44
    %v90 = vunpack.c.l.b16 %v45
    %v91 = vunpack.c.l.b16 %v46
    %v92 = vpack.c.b16 %v77, %v76
    %v93 = vpack.c.b16 %v79, %v78
    %v94 = vpack.c.b16 %v81, %v80
    %v95 = vpack.c.b16 %v83, %v82
    %v96 = vpack.c.b16 %v85, %v84
    %v97 = vpack.c.b16 %v87, %v86
    %v98 = vpack.c.b16 %v89, %v88
    %v99 = vpack.c.b16 %v91, %v90
    %108 = vmatprep.subr.bf16.mxu0 0
    %109 = vmatpush1.bf16.msra.mxu0 %v92
    %110 = vmatprep.subr.bf16.mxu0 0
    %111 = vmatpush1.bf16.msra.mxu0 %v93
    %112 = vmatprep.subr.bf16.mxu0 0
    %113 = vmatpush1.bf16.msra.mxu0 %v94
    %114 = vmatprep.subr.bf16.mxu0 0
    %115 = vmatpush1.bf16.msra.mxu0 %v95
    %116 = vmatprep.subr.bf16.mxu0 0
    %117 = vmatpush1.bf16.msra.mxu0 %v96
    %118 = vmatprep.subr.bf16.mxu0 0
    %119 = vmatpush1.bf16.msra.mxu0 %v97
    %120 = vmatprep.subr.bf16.mxu0 0
    %121 = vmatpush1.bf16.msra.mxu0 %v98
    %122 = vmatprep.subr.bf16.mxu0 0
    %123 = vmatpush1.bf16.msra.mxu0 %v99
    %124 = vmatprep.subr.bf16.mxu0 0
    %125 = vmatpush1.bf16.msra.mxu0 0
    %126 = vmatprep.subr.bf16.mxu0 0
    %127 = vmatpush1.bf16.msra.mxu0 0
    %128 = vmatprep.subr.bf16.mxu0 0
    %129 = vmatpush1.bf16.msra.mxu0 0
    %130 = vmatprep.subr.bf16.mxu0 0
    %131 = vmatpush1.bf16.msra.mxu0 0
    %132 = vmatprep.subr.bf16.mxu0 0
    %133 = vmatpush1.bf16.msra.mxu0 0
    %134 = vmatprep.subr.bf16.mxu0 0
    %135 = vmatpush1.bf16.msra.mxu0 0
    %136 = vmatprep.subr.bf16.mxu0 0
    %137 = vmatpush1.bf16.msra.mxu0 0
    %138 = vmatprep.subr.bf16.mxu0 0
    %139 = vmatpush1.bf16.msra.mxu0 0
    %140 = vmatprep.mubr.bf16.mxu0 0
    %141 = vmatmul.mubr.bf16.gmra.mrb[0].mxu0 %v58
    %v142 = vpop.f32.mrb[0].mxu0
    %v143 = vadd.f32 %v52, %v142
    %v144 = vpop.f32.mrb[0].mxu0
    %v145 = vpop.f32.mrb[0].mxu0
    %v146 = vadd.f32 %v52, %v145
    %v147 = vpop.f32.mrb[0].mxu0
    %148 = vdwg.mxu0
    %149 = vst [vmem:[%s3] sm:$0xff] %v143
    %150 = vst [vmem:[%s3 + $0x8] sm:$0xff] %v146
    // Predicated region
    $region18: #{_linear_apply.1} parent=1 // pred_check
      _
    $region19: #{_linear_apply.1} parent=1 // pred_check_branch
      %152 = sbr.rel (0) target = $region21
    $region20: #{_linear_apply.1} parent=1 // pred_region
      _
    $region21: #{_linear_apply.1} parent=1 // pred_fallthru
      _
    // Predicated region
    $region22: #{_linear_apply.1} parent=1 // pred_check
      _
    $region23: #{_linear_apply.1} parent=1 // pred_check_branch
      %154 = sbr.rel (0) target = $region25
    $region24: #{_linear_apply.1} parent=1 // pred_region
      _
    $region25: #{_linear_apply.1} parent=1 // pred_fallthru
      _
    %155 = vsyncpa [#allocation3], 1

</llo_original>
